<compile_context>
chip_gen: v6e
topology: v6e:2x2x1
jax: 0.10.0
libtpu: 0.0.40
codegen_flags: <defaults>
</compile_context>

<pallas_src>
import math

import jax
import jax.numpy as jnp
from jax.experimental import pallas as pl
from jax.experimental.pallas import tpu as pltpu


def _round_up(v, m):
    return ((v + m - 1) // m) * m


def _vmem_caps():
    """Return (tile-budget bytes, vmem_limit cap bytes) for this chip generation."""
    phys = None
    try:
        phys = int(getattr(pltpu.get_tpu_info(), "vmem_capacity_bytes"))
    except Exception:
        phys = None
    if phys is None or phys <= (64 << 20):
        # v7x (64 MiB / TensorCore) or unknown: leave headroom for Mosaic internal
        # scratch, semaphores and the (tm, r) intermediate.
        return 40 << 20, 50 << 20
    # v5e / v6e: 128 MiB physical VMEM, but tiny default scoped limits (16/32 MiB),
    # so a large explicit vmem_limit_bytes is what keeps tm >= 512 at big in_features.
    return 96 << 20, 100 << 20


def _lora_kernel(x_ref, at_ref, bt_ref, o_ref, acc_ref):
    # x_ref : (tm, tk)        activation tile (bf16 by default)
    # at_ref: (tk, r)         pre-transposed lora_A, K-slice
    # bt_ref: (r, out_cols)   pre-transposed lora_B with scale folded in (resident)
    # o_ref : (tm, out_cols)  output tile (resident across the K axis)
    # acc_ref: (tm, r) f32 VMEM scratch accumulator
    k = pl.program_id(1)

    @pl.when(k == 0)
    def _():
        acc_ref[...] = jnp.zeros_like(acc_ref)

    acc_ref[...] += jnp.dot(x_ref[...], at_ref[...],
                            preferred_element_type=jnp.float32)

    @pl.when(k == pl.num_programs(1) - 1)
    def _():
        xa = acc_ref[...].astype(bt_ref.dtype)       # bf16 second dot, f32 accumulate
        y = jnp.dot(xa, bt_ref[...], preferred_element_type=jnp.float32)
        o_ref[...] = y.astype(o_ref.dtype)


def lora_forward(x, lora_A, lora_B, *, lora_alpha, r, tm=512,
                 activation_dtype=jnp.bfloat16, max_tk=2048,
                 vmem_budget_bytes=None):
    """LoRA delta forward: y = x @ lora_A.T @ lora_B.T * (lora_alpha / r).

    x: (..., in_features) -> (..., out_features).  Dropout p=0.0 is the identity.
    activation_dtype=jnp.bfloat16 by default (no-op if x is already bf16); pass
    jnp.float32 (or None) for exact-f32 streaming.
    """
    scale = lora_alpha / r
    in_features = lora_A.shape[1]
    out_features = lora_B.shape[0]

    orig_shape = x.shape
    out_dtype = x.dtype
    x2d = x.reshape(-1, in_features)
    if activation_dtype is not None and x2d.dtype != activation_dtype:
        x2d = x2d.astype(activation_dtype)
    M = x2d.shape[0]
    compute_dtype = x2d.dtype

    # Weights: pre-transpose once; fold the LoRA scale into the tiny B matrix (f32,
    # exact) before casting to the streaming dtype.
    a_t = lora_A.T.astype(compute_dtype)                                # (in_f, r)
    b_t = (lora_B.astype(jnp.float32) * scale).T.astype(compute_dtype)  # (r, out_f)

    # Lane-dense output only when the padding is cheap; otherwise use the exact
    # last dim (full-array block dim is legal) and accept masked stores.
    pad_to = _round_up(out_features, 128)
    if (pad_to != out_features and out_features >= 512
            and (pad_to - out_features) * 8 <= out_features):
        out_cols = pad_to
        b_t = jnp.pad(b_t, ((0, 0), (0, out_cols - out_features)))
    else:
        out_cols = out_features

    # K tile: full K when it fits; otherwise the largest multiple of 128 (<= max_tk)
    # that divides in_features exactly (so no K-remainder garbage can reach the
    # accumulator).  Transformer hidden sizes are multiples of 128 in practice.
    if in_features <= max_tk:
        tk = in_features
    else:
        tk = in_features
        for cand in range(max_tk - (max_tk % 128), 127, -128):
            if in_features % cand == 0:
                tk = cand
                break

    budget, limit_cap = _vmem_caps()
    if vmem_budget_bytes is not None:
        budget = vmem_budget_bytes

    x_bytes = jnp.dtype(compute_dtype).itemsize
    o_bytes = jnp.dtype(out_dtype).itemsize
    w_bytes = jnp.dtype(compute_dtype).itemsize

    def tile_bytes(t):
        return (2 * t * tk * x_bytes            # double-buffered x tiles
                + 2 * tk * r * w_bytes          # double-buffered A K-slices
                + 2 * r * out_cols * w_bytes    # B (resident)
                + 2 * t * out_cols * o_bytes    # double-buffered out tiles
                + t * r * 4)                    # f32 accumulator scratch

    # Row tile: large enough to amortize per-step overhead (>=128 rows), small
    # enough to fit the per-chip VMEM budget and to give the grid multiple steps
    # so v7x's two TensorCores both get work on the "parallel" M axis.
    tm_eff = min(tm, _round_up(max(pl.cdiv(M, 8), 1), 8))
    tm_eff = max(tm_eff, min(_round_up(M, 8), 128))
    tm_eff = _round_up(tm_eff, 8)
    while tm_eff > 8 and tile_bytes(tm_eff) > budget:
        tm_eff = _round_up(tm_eff // 2, 8)

    grid = (pl.cdiv(M, tm_eff), max(1, in_features // tk))
    vmem_limit = int(min(limit_cap, max(32 << 20, tile_bytes(tm_eff) * 5 // 4)))

    out = pl.pallas_call(
        _lora_kernel,
        out_shape=jax.ShapeDtypeStruct((M, out_cols), out_dtype),
        grid_spec=pltpu.PrefetchScalarGridSpec(
            num_scalar_prefetch=0,
            grid=grid,
            in_specs=[
                pl.BlockSpec((tm_eff, tk), lambda i, k: (i, k)),
                pl.BlockSpec((tk, r), lambda i, k: (k, 0)),
                pl.BlockSpec((r, out_cols), lambda i, k: (0, 0)),
            ],
            out_specs=pl.BlockSpec((tm_eff, out_cols), lambda i, k: (i, 0)),
            scratch_shapes=[pltpu.VMEM((tm_eff, r), jnp.float32)],
        ),
        compiler_params=pltpu.CompilerParams(
            dimension_semantics=("parallel", "arbitrary"),
            vmem_limit_bytes=vmem_limit,
        ),
    )(x2d, a_t, b_t)

    if out_cols != out_features:
        out = out[:, :out_features]
    return out.reshape(*orig_shape[:-1], out_features)


if __name__ == "__main__":
    # Deterministic parameters mirroring LowRankLinear.__init__ (small shapes).
    in_features = 32
    out_features = 32
    r = 8
    lora_alpha = 16
    scale = lora_alpha / r

    key = jax.random.PRNGKey(0)
    k_x, k_a, k_b = jax.random.split(key, 3)

    # kaiming_uniform_(a=sqrt(5)) on (r, in_features) -> U(-1/sqrt(in_f), 1/sqrt(in_f))
    bound = 1.0 / math.sqrt(in_features)
    lora_A = jax.random.uniform(
        k_a, (r, in_features), dtype=jnp.float32, minval=-bound, maxval=bound
    )
    # Module init: nn.init.zeros_(lora_B) -> delta output is exactly zero.
    lora_B_zero = jnp.zeros((out_features, r), dtype=jnp.float32)
    # Non-zero B to exercise the matmul path (post-training state).
    lora_B_rand = 0.1 * jax.random.normal(k_b, (out_features, r), dtype=jnp.float32)

    # small input: batch=2, seq=8, hidden=in_features
    x = jax.random.normal(k_x, (2, 8, in_features), dtype=jnp.float32)

    # High-precision reference.
    y_ref = jnp.einsum("bsi,ri->bsr", x, lora_A,
                       precision=jax.lax.Precision.HIGHEST)
    y_ref = jnp.einsum("bsr,or->bso", y_ref, lora_B_rand,
                       precision=jax.lax.Precision.HIGHEST) * scale

    # 1) Default path (bf16 streaming): looser tolerance.
    y_bf16 = lora_forward(x, lora_A, lora_B_rand, lora_alpha=lora_alpha, r=r)
    jax.block_until_ready(y_bf16)
    assert y_bf16.shape == (2, 8, out_features)
    err_bf16 = float(jnp.max(jnp.abs(y_bf16 - y_ref)))
    assert err_bf16 < 3e-2, f"bf16 path mismatch (max abs err {err_bf16})"

    # 2) f32 streaming path: tight tolerance.
    y_f32 = lora_forward(x, lora_A, lora_B_rand, lora_alpha=lora_alpha, r=r,
                         activation_dtype=jnp.float32)
    jax.block_until_ready(y_f32)
    err_f32 = float(jnp.max(jnp.abs(y_f32 - y_ref)))
    assert err_f32 < 1e-3, f"f32 path mismatch (max abs err {err_f32})"

    # 3) Init-state check (B = 0 -> output exactly zero), as in the PyTorch module.
    y0 = lora_forward(x, lora_A, lora_B_zero, lora_alpha=lora_alpha, r=r)
    jax.block_until_ready(y0)
    assert float(jnp.max(jnp.abs(y0))) == 0.0

    print("KERNEL_OK")
</pallas_src>

<mosaic_0001>
module attributes {stable_mosaic.version = 11 : i64} {
  func.func @_lora_kernel(%arg0: i32, %arg1: i32, %arg2: memref<16x32xbf16, #tpu.memory_space<vmem>>, %arg3: memref<32x8xbf16, #tpu.memory_space<vmem>>, %arg4: memref<8x32xbf16, #tpu.memory_space<vmem>>, %arg5: memref<16x32xf32, #tpu.memory_space<vmem>>, %arg6: memref<16x8xf32, #tpu.memory_space<vmem>>) attributes {dimension_semantics = [#tpu.dimension_semantics<parallel>, #tpu.dimension_semantics<arbitrary>], iteration_bounds = array<i64: 1, 1>, scalar_prefetch = 0 : i64, scratch_operands = 1 : i64, tpu.core_type = #tpu.core_type<tc>, window_params = [{transform_indices = @transform_0, window_bounds = array<i64: 16, 32>}, {transform_indices = @transform_1, window_bounds = array<i64: 32, 8>}, {pipeline_mode = #tpu.pipeline_mode<synchronous>, transform_indices = @transform_2, window_bounds = array<i64: 8, 32>}, {transform_indices = @transform_3, window_bounds = array<i64: 16, 32>}]} {
    %c0_i32 = arith.constant 0 : i32
    %0 = arith.cmpi eq, %arg1, %c0_i32 : i32
    %1 = arith.extui %0 : i1 to i32
    %c0_i32_0 = arith.constant 0 : i32
    %2 = arith.cmpi ne, %1, %c0_i32_0 : i32
    scf.if %2 {
      %cst_10 = arith.constant 0.000000e+00 : f32
      %12 = vector.broadcast %cst_10 : f32 to vector<16x8xf32>
      %c0_11 = arith.constant 0 : index
      %c0_12 = arith.constant 0 : index
      %13 = vector.load %arg6[%c0_11, %c0_12] : memref<16x8xf32, #tpu.memory_space<vmem>>, vector<16x8xf32>
      tpu.vector_store %arg6[%c0_11, %c0_12], %12 {strides = array<i32>} : memref<16x8xf32, #tpu.memory_space<vmem>>, vector<16x8xf32>,
    } else {
    }
    %c0 = arith.constant 0 : index
    %c0_1 = arith.constant 0 : index
    %3 = vector.load %arg6[%c0, %c0_1] : memref<16x8xf32, #tpu.memory_space<vmem>>, vector<16x8xf32>
    %c0_2 = arith.constant 0 : index
    %c0_3 = arith.constant 0 : index
    %4 = vector.load %arg2[%c0_2, %c0_3] : memref<16x32xbf16, #tpu.memory_space<vmem>>, vector<16x32xbf16>
    %c0_4 = arith.constant 0 : index
    %c0_5 = arith.constant 0 : index
    %5 = vector.load %arg3[%c0_4, %c0_5] : memref<32x8xbf16, #tpu.memory_space<vmem>>, vector<32x8xbf16>
    %cst = arith.constant dense<0.000000e+00> : vector<16x8xf32>
    %6 = tpu.matmul %4, %5, %cst {dimension_numbers = #tpu.dot_dimension_numbers<[1], [0], [0], [1], [0, 0, 1, 1], [], []>} : vector<16x32xbf16>, vector<32x8xbf16>, vector<16x8xf32> -> vector<16x8xf32>
    %7 = arith.addf %3, %6 : vector<16x8xf32>
    %c0_6 = arith.constant 0 : index
    %c0_7 = arith.constant 0 : index
    %8 = vector.load %arg6[%c0_6, %c0_7] : memref<16x8xf32, #tpu.memory_space<vmem>>, vector<16x8xf32>
    tpu.vector_store %arg6[%c0_6, %c0_7], %7 {strides = array<i32>} : memref<16x8xf32, #tpu.memory_space<vmem>>, vector<16x8xf32>,
    %c0_i32_8 = arith.constant 0 : i32
    %9 = arith.cmpi eq, %arg1, %c0_i32_8 : i32
    %10 = arith.extui %9 : i1 to i32
    %c0_i32_9 = arith.constant 0 : i32
    %11 = arith.cmpi ne, %10, %c0_i32_9 : i32
    scf.if %11 {
      %c0_10 = arith.constant 0 : index
      %c0_11 = arith.constant 0 : index
      %12 = vector.load %arg6[%c0_10, %c0_11] : memref<16x8xf32, #tpu.memory_space<vmem>>, vector<16x8xf32>
      %13 = arith.truncf %12 : vector<16x8xf32> to vector<16x8xbf16>
      %c0_12 = arith.constant 0 : index
      %c0_13 = arith.constant 0 : index
      %14 = vector.load %arg4[%c0_12, %c0_13] : memref<8x32xbf16, #tpu.memory_space<vmem>>, vector<8x32xbf16>
      %cst_14 = arith.constant dense<0.000000e+00> : vector<16x32xf32>
      %15 = tpu.matmul %13, %14, %cst_14 {dimension_numbers = #tpu.dot_dimension_numbers<[1], [0], [0], [1], [0, 0, 1, 1], [], []>} : vector<16x8xbf16>, vector<8x32xbf16>, vector<16x32xf32> -> vector<16x32xf32>
      %c0_15 = arith.constant 0 : index
      %c0_16 = arith.constant 0 : index
      %16 = vector.load %arg5[%c0_15, %c0_16] : memref<16x32xf32, #tpu.memory_space<vmem>>, vector<16x32xf32>
      tpu.vector_store %arg5[%c0_15, %c0_16], %15 {strides = array<i32>} : memref<16x32xf32, #tpu.memory_space<vmem>>, vector<16x32xf32>,
    } else {
    }
    return
  }
  func.func @transform_0(%arg0: i32, %arg1: i32) -> (i32, i32) {
    %c0_i32 = arith.constant 0 : i32
    return %arg0, %arg1 : i32, i32
  }
  func.func @transform_1(%arg0: i32, %arg1: i32) -> (i32, i32) {
    %c0_i32 = arith.constant 0 : i32
    %c0_i32_0 = arith.constant 0 : i32
    return %arg1, %c0_i32 : i32, i32
  }
  func.func @transform_2(%arg0: i32, %arg1: i32) -> (i32, i32) {
    %c0_i32 = arith.constant 0 : i32
    %c0_i32_0 = arith.constant 0 : i32
    %c0_i32_1 = arith.constant 0 : i32
    return %c0_i32, %c0_i32_0 : i32, i32
  }
  func.func @transform_3(%arg0: i32, %arg1: i32) -> (i32, i32) {
    %c0_i32 = arith.constant 0 : i32
    %c0_i32_0 = arith.constant 0 : i32
    return %arg0, %c0_i32 : i32, i32
  }
}

</mosaic_0001>

<llo_original>
// kernel: tpu_custom_call.1
$region0: #{tpu_custom_call.1}
  #allocation0 [shape = 'u32[]', space=smem, size = 0x4, offset = 0x4, fixed_abs, tag = 'smem constant byte address 0x4 - core index']
  #allocation1 [shape = 'u32[144,128]{1,0:T(1,128)}', space=vmem, size = 0x12000, scoped, tag = 'internal scratch']
  #allocation2 [shape = 'f32[16,8]{1,0:T(8,128)}', space=vmem, size = 0x2000, scoped, tag = 'scratch operand']
  %s0 = inlined_call_operand.vmem [shape: bf16[16,32], index: 0, kind: input, shape index: {}]
  %s1 = inlined_call_operand.vmem [shape: bf16[32,8], index: 1, kind: input, shape index: {}]
  %s2 = inlined_call_operand.vmem [shape: bf16[8,32], index: 2, kind: input, shape index: {}]
  %s3 = inlined_call_operand.hbm [shape: f32[16,32], index: 3, kind: output, shape index: {}]
  %s4 = sld [smem:[#allocation0]]
  $region30: #{tpu_custom_call.1} parent=0
    _
  %s6 = ssub.s32 1, %s4
  %s7 = scalar_select 0, %s6, %s4
  $region1: #{tpu_custom_call.1} parent=0
    #allocation3 [shape = 'u8[8192]{0}', space=vmem, size = 0x2000, scoped, tag = 'output window, operand 0, single buffered']
    #allocation4 [shape = 's32[1]{0}', space=sflag, size = 0x4, scoped, tag = 'scoped memory for tpu_custom_call.1']
    %8 = vsyncpa [#allocation4], 0
    // Predicated region
    $region2: #{tpu_custom_call.1} parent=1 // pred_check
      _
    $region3: #{tpu_custom_call.1} parent=1 // pred_check_branch
      %10 = sbr.rel (0) target = $region5
    $region4: #{tpu_custom_call.1} parent=1 // pred_region
      _
    $region5: #{tpu_custom_call.1} parent=1 // pred_fallthru
      _
    // Predicated region
    $region6: #{tpu_custom_call.1} parent=1 // pred_check
      _
    $region7: #{tpu_custom_call.1} parent=1 // pred_check_branch
      %12 = sbr.rel (0) target = $region9
    $region8: #{tpu_custom_call.1} parent=1 // pred_region
      _
    $region9: #{tpu_custom_call.1} parent=1 // pred_fallthru
      _
    // Predicated region
    $region10: #{tpu_custom_call.1} parent=1 // pred_check
      _
    $region11: #{tpu_custom_call.1} parent=1 // pred_check_branch
      %14 = sbr.rel (0) target = $region13
    $region12: #{tpu_custom_call.1} parent=1 // pred_region
      _
    $region13: #{tpu_custom_call.1} parent=1 // pred_fallthru
      _
    %p16 = scmp.eq.s32.totalorder 0, 0
    // Predicated region
    $region14: #{tpu_custom_call.1} parent=1 // pred_check
      %p17 = pneg %p16
    $region15: #{tpu_custom_call.1} parent=1 // pred_check_branch
      %19 = sbr.rel (%p17) target = $region17
    $region16: #{tpu_custom_call.1} parent=1 // pred_region
      %vm20 = vcmask 64512
      %21 = vst.msk [vmem:[#allocation2] sm:$0xff] %vm20, 0.0
      %22 = vst.msk [vmem:[#allocation2 + $0x8] sm:$0xff] %vm20, 0.0
    $region17: #{tpu_custom_call.1} parent=1 // pred_fallthru
      _
    %v23 = vld [vmem:[#allocation2] sm:$0xff]
    %v24 = vld [vmem:[#allocation2 + $0x8] sm:$0xff]
    %v25 = vld [vmem:[%s0] sm:$0xf]
    %v26 = vld [vmem:[%s0 + $0x4] sm:$0xf]
    %v27 = vld [vmem:[%s1] sm:$0xf]
    %v28 = vld [vmem:[%s1 + $0x4] sm:$0xf]
    %v29 = vld [vmem:[%s1 + $0x8] sm:$0xf]
    %v30 = vld [vmem:[%s1 + $0xc] sm:$0xf]
    %v33 = vunpack.c.l.b16 %v25
    %v34 = vunpack.c.l.b16 %v26
    %v35 = vpack.c.b16 %v34, %v33
    %v40 = vunpack.c.l.b16 %v27
    %v41 = vunpack.c.l.b16 %v28
    %v42 = vunpack.c.l.b16 %v29
    %v43 = vunpack.c.l.b16 %v30
    %v44 = vpack.c.b16 %v41, %v40
    %v45 = vpack.c.b16 %v43, %v42
    %vm48 = vcmask 261120
    %v50 = vsel %vm48, %v35, 0
    %52 = vmatprep.subr.bf16.mxu0 0
    %53 = vmatpush1.bf16.msra.mxu0 0
    %54 = vmatprep.subr.bf16.mxu0 0
    %55 = vmatpush1.bf16.msra.mxu0 0
    %56 = vmatprep.subr.bf16.mxu0 0
    %57 = vmatpush1.bf16.msra.mxu0 0
    %58 = vmatprep.subr.bf16.mxu0 0
    %59 = vmatpush1.bf16.msra.mxu0 0
    %60 = vmatprep.subr.bf16.mxu0 0
    %61 = vmatpush1.bf16.msra.mxu0 0
    %62 = vmatprep.subr.bf16.mxu0 0
    %63 = vmatpush1.bf16.msra.mxu0 0
    %64 = vmatprep.subr.bf16.mxu0 0
    %65 = vmatpush1.bf16.msra.mxu0 %v45
    %66 = vmatprep.subr.bf16.mxu0 0
    %67 = vmatpush1.bf16.msra.mxu0 %v44
    %68 = vmatprep.subr.bf16.mxu0 0
    %69 = vmatpush2.bf16.msra.mxu0 0
    %70 = vmatprep.subr.bf16.mxu0 0
    %71 = vmatpush2.bf16.msra.mxu0 0
    %72 = vmatprep.subr.bf16.mxu0 0
    %73 = vmatpush2.bf16.msra.mxu0 0
    %74 = vmatprep.subr.bf16.mxu0 0
    %75 = vmatpush2.bf16.msra.mxu0 0
    %76 = vmatprep.subr.bf16.mxu0 0
    %77 = vmatpush2.bf16.msra.mxu0 0
    %78 = vmatprep.subr.bf16.mxu0 0
    %79 = vmatpush2.bf16.msra.mxu0 0
    %80 = vmatprep.subr.bf16.mxu0 0
    %81 = vmatpush2.bf16.msra.mxu0 0
    %82 = vmatprep.subr.bf16.mxu0 0
    %83 = vmatpush2.bf16.msra.mxu0 0
    %84 = vmatprep.mubr.bf16.mxu0 0
    %85 = vmatmul.mubr.bf16.gmra.mxu0 %v50
    %v86 = vpop.f32.mrf.mxu0
    %v87 = vadd.f32 0.0, %v86
    %v88 = vpop.f32.mrf.mxu0
    %v89 = vpop.f32.mrf.mxu0
    %v90 = vadd.f32 0.0, %v89
    %v91 = vpop.f32.mrf.mxu0
    %92 = vdwg.mxu0
    %v93 = vadd.f32 %v23, %v87
    %v94 = vadd.f32 %v24, %v90
    %vm95 = vcmask 64512
    %96 = vst.msk [vmem:[#allocation2] sm:$0xff] %vm95, %v93
    %97 = vst.msk [vmem:[#allocation2 + $0x8] sm:$0xff] %vm95, %v94
    // Predicated region
    $region18: #{tpu_custom_call.1} parent=1 // pred_check
      %p98 = pneg %p16
    $region19: #{tpu_custom_call.1} parent=1 // pred_check_branch
      %100 = sbr.rel (%p98) target = $region21
    $region20: #{tpu_custom_call.1} parent=1 // pred_region
      %v101 = vld [vmem:[#allocation2] sm:$0xff]
      %v102 = vld [vmem:[#allocation2 + $0x8] sm:$0xff]
      %v103 = vpack.c.bf16 %v102, %v101
      %v104 = vld [vmem:[%s2] sm:$0xf]
      %v106 = vsel %vm95, %v103, 0
      %vm108 = vcmask 1043456
      %v110 = vsel %vm108, %v104, 0
      %112 = vmatprep.subr.bf16.mxu0 0
      %113 = vmatpush1.bf16.msra.mxu0 0
      %114 = vmatprep.subr.bf16.mxu0 0
      %115 = vmatpush1.bf16.msra.mxu0 0
      %116 = vmatprep.subr.bf16.mxu0 0
      %117 = vmatpush1.bf16.msra.mxu0 0
      %118 = vmatprep.subr.bf16.mxu0 0
      %119 = vmatpush1.bf16.msra.mxu0 0
      %120 = vmatprep.subr.bf16.mxu0 0
      %121 = vmatpush1.bf16.msra.mxu0 0
      %122 = vmatprep.subr.bf16.mxu0 0
      %123 = vmatpush1.bf16.msra.mxu0 0
      %124 = vmatprep.subr.bf16.mxu0 0
      %125 = vmatpush1.bf16.msra.mxu0 0
      %126 = vmatprep.subr.bf16.mxu0 0
      %127 = vmatpush1.bf16.msra.mxu0 %v110
      %128 = vmatprep.subr.bf16.mxu0 0
      %129 = vmatpush2.bf16.msra.mxu0 0
      %130 = vmatprep.subr.bf16.mxu0 0
      %131 = vmatpush2.bf16.msra.mxu0 0
      %132 = vmatprep.subr.bf16.mxu0 0
      %133 = vmatpush2.bf16.msra.mxu0 0
      %134 = vmatprep.subr.bf16.mxu0 0
      %135 = vmatpush2.bf16.msra.mxu0 0
      %136 = vmatprep.subr.bf16.mxu0 0
      %137 = vmatpush2.bf16.msra.mxu0 0
      %138 = vmatprep.subr.bf16.mxu0 0
      %139 = vmatpush2.bf16.msra.mxu0 0
      %140 = vmatprep.subr.bf16.mxu0 0
      %141 = vmatpush2.bf16.msra.mxu0 0
      %142 = vmatprep.subr.bf16.mxu0 0
      %143 = vmatpush2.bf16.msra.mxu0 0
      %144 = vmatprep.mubr.bf16.mxu0 0
      %145 = vmatmul.mubr.bf16.gmra.mxu0 %v106
      %v146 = vpop.f32.mrf.mxu0
      %v147 = vadd.f32 0.0, %v146
      %v148 = vpop.f32.mrf.mxu0
      %v149 = vpop.f32.mrf.mxu0
      %v150 = vadd.f32 0.0, %v149
      %v151 = vpop.f32.mrf.mxu0
      %152 = vdwg.mxu0
      %153 = vst.msk [vmem:[#allocation3] sm:$0xff] %vm48, %v147
      %154 = vst.msk [vmem:[#allocation3 + $0x8] sm:$0xff] %vm48, %v150
    $region21: #{tpu_custom_call.1} parent=1 // pred_fallthru
      _
    // Predicated region
    $region22: #{tpu_custom_call.1} parent=1 // pred_check
      _
    $region23: #{tpu_custom_call.1} parent=1 // pred_check_branch
      %156 = sbr.rel (0) target = $region25
    $region24: #{tpu_custom_call.1} parent=1 // pred_region
      %s158 = ssub.s32 256, 256
      %159 = vsyncadd [#allocation4], %s158
      %s160 = sshll.u32 [#allocation3], 4
      %s161 = int_to_ptr.vmem [resolvable:$true] %s160
      %166 = dma.vmem_to_hbm [thread:$0]  %s161, 256, %s3, [#allocation4], 128, 128, 8
    $region25: #{tpu_custom_call.1} parent=1 // pred_fallthru
      _
    // Predicated region
    $region26: #{tpu_custom_call.1} parent=1 // pred_check
      _
    $region27: #{tpu_custom_call.1} parent=1 // pred_check_branch
      %168 = sbr.rel (0) target = $region29
    $region28: #{tpu_custom_call.1} parent=1 // pred_region
      %169 = dma.done [#allocation4], 256
    $region29: #{tpu_custom_call.1} parent=1 // pred_fallthru
      _
    %170 = vsyncpa [#allocation4], 1

</llo_original>
